<compile_context>
chip_gen: v6e
topology: v6e:2x2x1
jax: 0.10.0
libtpu: 0.0.40
codegen_flags: <defaults>
</compile_context>

<pallas_src>
import functools

import jax
import jax.numpy as jnp
from jax.experimental import pallas as pl
from jax.experimental.pallas import tpu as pltpu


def _round_up(n, m):
    return ((n + m - 1) // m) * m


def _vmem_capacity_bytes():
    try:
        return int(pltpu.get_tpu_info().vmem_capacity_bytes)
    except Exception:
        return 64 * (1 << 20)   # conservative fallback (v7x per-core VMEM)


# Max ids per pallas_call on the SMEM scalar-prefetch paths (1-D SMEM arrays
# pad to the next power of two; keep the prefetch array small).
_SMEM_ID_CHUNK = 32 * 1024


# ---------------------------------------------------------------------------
# Path A: small vocab, table resident in VMEM, one-hot gather on the MXU.
# ---------------------------------------------------------------------------
def _gather_onehot_kernel(ids_ref, w_ref, o_ref):
    # ids_ref: VMEM (T, 1) int32; w_ref: VMEM (V_pad, H); o_ref: VMEM (T, H)
    ids = ids_ref[...]                                       # (T, 1)
    t, v_pad = ids.shape[0], w_ref.shape[0]
    onehot = (jax.lax.broadcasted_iota(jnp.int32, (t, v_pad), 1) == ids)
    onehot = onehot.astype(w_ref.dtype)                      # exact 0/1 rows
    o_ref[...] = jnp.dot(onehot, w_ref[...],
                         preferred_element_type=jnp.float32).astype(o_ref.dtype)


def _gather_onehot(weight, ids_col, tokens_per_step, vmem_limit_bytes, cost):
    n_tok = ids_col.shape[0]               # padded to a multiple of T
    V_pad, H = weight.shape
    return pl.pallas_call(
        _gather_onehot_kernel,
        out_shape=jax.ShapeDtypeStruct((n_tok, H), weight.dtype),
        grid_spec=pltpu.PrefetchScalarGridSpec(
            num_scalar_prefetch=0,
            grid=(n_tok // tokens_per_step,),
            in_specs=[
                pl.BlockSpec((tokens_per_step, 1), lambda i: (i, 0)),
                # Full table, constant block index -> DMA'd once, reused.
                pl.BlockSpec((V_pad, H), lambda i: (0, 0)),
            ],
            out_specs=pl.BlockSpec((tokens_per_step, H), lambda i: (i, 0)),
        ),
        compiler_params=pltpu.CompilerParams(
            dimension_semantics=("parallel",),
            vmem_limit_bytes=vmem_limit_bytes),
        cost_estimate=cost,
    )(ids_col, weight)


# ---------------------------------------------------------------------------
# Path B: medium vocab, table resident in VMEM, per-row on-chip copies.
# ---------------------------------------------------------------------------
def _gather_rowcopy_kernel(ids_ref, w_ref, o_ref, *, tokens_per_step):
    # ids_ref: SMEM (n_tok,) int32 (scalar prefetch); w_ref: VMEM (V_pad, H)
    base = pl.program_id(0) * tokens_per_step

    def body(t, carry):
        row = ids_ref[base + t]
        o_ref[pl.ds(t, 1), :] = w_ref[pl.ds(row, 1), :]
        return carry

    jax.lax.fori_loop(0, tokens_per_step, body, 0, unroll=8)


def _gather_rowcopy(weight, flat_ids, tokens_per_step, vmem_limit_bytes, cost):
    n_tok = flat_ids.shape[0]
    V_pad, H = weight.shape
    kernel = functools.partial(_gather_rowcopy_kernel,
                               tokens_per_step=tokens_per_step)
    return pl.pallas_call(
        kernel,
        out_shape=jax.ShapeDtypeStruct((n_tok, H), weight.dtype),
        grid_spec=pltpu.PrefetchScalarGridSpec(
            num_scalar_prefetch=1,                     # flat_ids -> SMEM
            grid=(n_tok // tokens_per_step,),
            in_specs=[pl.BlockSpec((V_pad, H), lambda i, ids: (0, 0))],
            out_specs=pl.BlockSpec((tokens_per_step, H),
                                   lambda i, ids: (i, 0)),
        ),
        compiler_params=pltpu.CompilerParams(
            dimension_semantics=("parallel",),
            vmem_limit_bytes=vmem_limit_bytes),
        cost_estimate=cost,
    )(flat_ids, weight)


# ---------------------------------------------------------------------------
# Path C: large vocab, table in HBM; batched row DMAs straight into the
# output block (no VMEM scratch slab, no extra VMEM->VMEM copy).
# ---------------------------------------------------------------------------
def _gather_hbm_kernel(ids_ref, w_hbm, o_ref, sem, *, tokens_per_step):
    # ids_ref: SMEM (n_tok,) int32; w_hbm: HBM (V_pad, H); o_ref: VMEM (T, H)
    base = pl.program_id(0) * tokens_per_step

    def issue(t, carry):
        row = ids_ref[base + t]
        pltpu.make_async_copy(w_hbm.at[row], o_ref.at[t], sem.at[t]).start()
        return carry

    jax.lax.fori_loop(0, tokens_per_step, issue, 0)

    def wait(t, carry):
        row = ids_ref[base + t]          # same descriptor as the start()
        pltpu.make_async_copy(w_hbm.at[row], o_ref.at[t], sem.at[t]).wait()
        return carry

    jax.lax.fori_loop(0, tokens_per_step, wait, 0)


def _gather_hbm(weight, flat_ids, tokens_per_step, vmem_limit_bytes, cost):
    n_tok = flat_ids.shape[0]
    V_pad, H = weight.shape
    kernel = functools.partial(_gather_hbm_kernel,
                               tokens_per_step=tokens_per_step)
    return pl.pallas_call(
        kernel,
        out_shape=jax.ShapeDtypeStruct((n_tok, H), weight.dtype),
        grid_spec=pltpu.PrefetchScalarGridSpec(
            num_scalar_prefetch=1,
            grid=(n_tok // tokens_per_step,),
            in_specs=[pl.BlockSpec(memory_space=pl.ANY)],   # raw HBM ref
            out_specs=pl.BlockSpec((tokens_per_step, H),
                                   lambda i, ids: (i, 0)),
            scratch_shapes=[pltpu.SemaphoreType.DMA((tokens_per_step,))],
        ),
        compiler_params=pltpu.CompilerParams(
            dimension_semantics=("parallel",),
            vmem_limit_bytes=vmem_limit_bytes),
        cost_estimate=cost,
    )(flat_ids, weight)


# ---------------------------------------------------------------------------
# Wrapper: strategy selection, padding, index clipping, VMEM budgeting.
# ---------------------------------------------------------------------------
def embedding_gather(weight, flat_ids, *, tokens_per_step=None,
                     vmem_table_budget_bytes=None,
                     onehot_vocab_limit=2048,
                     force_path=None):
    """out[t, :] = weight[flat_ids[t], :] for every token t, on-TPU via Pallas."""
    V, H = weight.shape
    n_tok = int(flat_ids.shape[0])
    itemsize = weight.dtype.itemsize

    # Index_map / DMA addresses have no runtime bounds check -> keep ids valid.
    # (Note: this silently remaps out-of-range ids; torch would raise.)
    ids = jnp.clip(flat_ids.astype(jnp.int32), 0, V - 1)

    capacity = _vmem_capacity_bytes()
    if vmem_table_budget_bytes is None:
        # Table is double-buffered by the pipeline even with a constant block
        # index, so keep 2*table well under physical VMEM (generation-aware:
        # ~22 MiB on v7x, ~45 MiB on v5e/v6e).
        vmem_table_budget_bytes = int(0.35 * capacity)

    table_bytes_est = _round_up(V, 8) * H * itemsize
    fits_vmem = table_bytes_est <= vmem_table_budget_bytes

    if force_path is not None:
        path = force_path
    elif fits_vmem and V <= onehot_vocab_limit:
        path = "onehot"
    elif fits_vmem:
        path = "rowcopy"
    else:
        path = "hbm"
    assert path in ("onehot", "rowcopy", "hbm"), path

    if tokens_per_step is None:
        tokens_per_step = min(256, _round_up(n_tok, 8))
    tokens_per_step = max(8, _round_up(tokens_per_step, 8))

    n_pad = _round_up(n_tok, tokens_per_step)
    if n_pad != n_tok:
        ids = jnp.pad(ids, (0, n_pad - n_tok))   # pad with row 0 (valid)

    # Pad vocab rows (zero rows, never selected after clipping). 128-row
    # alignment on the MXU path keeps the contraction dim lane-friendly.
    row_align = 128 if path == "onehot" else 8
    V_pad = _round_up(V, row_align)
    if V_pad != V:
        weight = jnp.pad(weight, ((0, V_pad - V), (0, 0)))
    table_bytes = V_pad * H * itemsize
    out_block_bytes = tokens_per_step * H * itemsize
    margin = 4 << 20

    if path == "onehot":
        vmem_need = (2 * table_bytes + 2 * tokens_per_step * 4
                     + 2 * out_block_bytes
                     + tokens_per_step * V_pad * 4 + margin)
        cost = pl.CostEstimate(
            flops=2 * n_pad * V_pad * H, transcendentals=0,
            bytes_accessed=table_bytes + n_pad * (4 + H * itemsize))
        out = _gather_onehot(weight, ids.reshape(n_pad, 1), tokens_per_step,
                             int(min(capacity, vmem_need)), cost)
        return out[:n_tok]

    if path == "rowcopy":
        vmem_need = 2 * table_bytes + 2 * out_block_bytes + margin
        runner = _gather_rowcopy
        cost_bytes = table_bytes + n_pad * (4 + H * itemsize)
    else:  # hbm
        vmem_need = 2 * out_block_bytes + margin
        runner = _gather_hbm
        cost_bytes = n_pad * (4 + 2 * H * itemsize)
    vmem_limit = int(min(capacity, vmem_need))
    cost = pl.CostEstimate(flops=0, transcendentals=0,
                           bytes_accessed=int(cost_bytes))

    # Chunk very long id vectors so the SMEM scalar-prefetch array stays small.
    chunk = max(tokens_per_step,
                (_SMEM_ID_CHUNK // tokens_per_step) * tokens_per_step)
    if n_pad <= chunk:
        out = runner(weight, ids, tokens_per_step, vmem_limit, cost)
    else:
        pieces = [runner(weight, ids[s:s + chunk], tokens_per_step,
                         vmem_limit, cost)
                  for s in range(0, n_pad, chunk)]
        out = jnp.concatenate(pieces, axis=0)
    return out[:n_tok]


class GraphEmbeddingJax:
    """JAX/Pallas port of GraphEmbedding (graph_type='', predict=None)."""

    def __init__(self, original_weight, new_embedding_raw, pad_token_id=0):
        H = new_embedding_raw.shape[-1]
        # __init__: prepend a zero row to new_embedding (padding index 0).
        zero_row = jnp.zeros((1, H), dtype=new_embedding_raw.dtype)
        self.new_weight = jnp.concatenate([zero_row, new_embedding_raw], axis=0)
        self.original_weight = original_weight
        self.padding_idx = pad_token_id  # forward of F.embedding is a plain gather
        # Cache the concatenated table once (graph_type=='', predict is None ->
        # weight() is static), instead of re-materializing it every forward.
        edge_features = self.new_weight[1:, :]
        self._cached_weight = jnp.concatenate(
            [self.original_weight, edge_features], axis=0)

    def weight(self):
        # graph_type == '' and predict is None -> no GraphEncoder / label-emb add.
        return self._cached_weight

    def __call__(self, x):
        w = self._cached_weight                 # 2-D -> the `else` branch of forward
        B, S = x.shape
        flat = x.reshape(-1)
        out = embedding_gather(w, flat)         # Pallas gather (the hot path)
        return out.reshape(B, S, w.shape[-1])


if __name__ == "__main__":
    key = jax.random.PRNGKey(0)
    k1, k2, k3 = jax.random.split(key, 3)

    V0, H = 32, 128       # original vocab size, config.hidden_size
    N_NEW = 9             # rows of raw new_embedding (before zero-row prepend)
    B, S = 2, 8           # batch, sequence length

    original_weight = jax.random.normal(k1, (V0, H), dtype=jnp.float32)
    new_embedding_raw = jax.random.normal(k2, (N_NEW, H), dtype=jnp.float32)

    mod = GraphEmbeddingJax(original_weight, new_embedding_raw, pad_token_id=0)

    total_vocab = V0 + N_NEW                   # size of the concatenated weight
    x = jax.random.randint(k3, (B, S), 0, total_vocab, dtype=jnp.int32)

    out = jax.block_until_ready(mod(x))        # default path -> one-hot MXU

    # Correctness vs. plain-JAX reference gather (== F.embedding forward).
    ref = mod.weight()[x]
    assert out.shape == (B, S, H)
    assert bool(jnp.allclose(out, ref))

    # Also exercise the medium-table (VMEM row-copy) and the large-table
    # (HBM-resident, direct-to-output row DMAs) paths.
    flat = x.reshape(-1)
    out_rc = jax.block_until_ready(
        embedding_gather(mod.weight(), flat, force_path="rowcopy"))
    assert bool(jnp.allclose(out_rc, ref.reshape(-1, H)))

    out_hbm = jax.block_until_ready(
        embedding_gather(mod.weight(), flat, force_path="hbm"))
    assert bool(jnp.allclose(out_hbm, ref.reshape(-1, H)))

    print("KERNEL_OK")
</pallas_src>

<mosaic_0001>
module attributes {stable_mosaic.version = 11 : i64} {
  func.func @_gather_onehot_kernel(%arg0: i32, %arg1: memref<16x1xi32, #tpu.memory_space<vmem>>, %arg2: memref<128x128xf32, #tpu.memory_space<vmem>>, %arg3: memref<16x128xf32, #tpu.memory_space<vmem>>) attributes {dimension_semantics = [#tpu.dimension_semantics<parallel>], iteration_bounds = array<i64: 1>, scalar_prefetch = 0 : i64, scratch_operands = 0 : i64, tpu.core_type = #tpu.core_type<tc>, window_params = [{transform_indices = @transform_0, window_bounds = array<i64: 16, 1>}, {pipeline_mode = #tpu.pipeline_mode<synchronous>, transform_indices = @transform_1, window_bounds = array<i64: 128, 128>}, {transform_indices = @transform_2, window_bounds = array<i64: 16, 128>}]} {
    %c0 = arith.constant 0 : index
    %c0_0 = arith.constant 0 : index
    %0 = vector.load %arg1[%c0, %c0_0] : memref<16x1xi32, #tpu.memory_space<vmem>>, vector<16x1xi32>
    %1 = tpu.iota {dimensions = array<i32: 1>} : vector<16x128xi32>
    %2 = vector.broadcast %0 : vector<16x1xi32> to vector<16x128xi32>
    %3 = arith.cmpi eq, %1, %2 : vector<16x128xi32>
    %4 = arith.extui %3 : vector<16x128xi1> to vector<16x128xi32>
    %5 = arith.sitofp %4 : vector<16x128xi32> to vector<16x128xf32>
    %c0_1 = arith.constant 0 : index
    %c0_2 = arith.constant 0 : index
    %6 = vector.load %arg2[%c0_1, %c0_2] : memref<128x128xf32, #tpu.memory_space<vmem>>, vector<128x128xf32>
    %cst = arith.constant dense<0.000000e+00> : vector<16x128xf32>
    %7 = tpu.matmul %5, %6, %cst {dimension_numbers = #tpu.dot_dimension_numbers<[1], [0], [0], [1], [0, 0, 1, 1], [], []>} : vector<16x128xf32>, vector<128x128xf32>, vector<16x128xf32> -> vector<16x128xf32>
    %c0_3 = arith.constant 0 : index
    %c0_4 = arith.constant 0 : index
    %8 = vector.load %arg3[%c0_3, %c0_4] : memref<16x128xf32, #tpu.memory_space<vmem>>, vector<16x128xf32>
    tpu.vector_store %arg3[%c0_3, %c0_4], %7 {strides = array<i32>} : memref<16x128xf32, #tpu.memory_space<vmem>>, vector<16x128xf32>,
    return
  }
  func.func @transform_0(%arg0: i32) -> (i32, i32) {
    %c0_i32 = arith.constant 0 : i32
    %c0_i32_0 = arith.constant 0 : i32
    return %arg0, %c0_i32 : i32, i32
  }
  func.func @transform_1(%arg0: i32) -> (i32, i32) {
    %c0_i32 = arith.constant 0 : i32
    %c0_i32_0 = arith.constant 0 : i32
    %c0_i32_1 = arith.constant 0 : i32
    return %c0_i32, %c0_i32_0 : i32, i32
  }
  func.func @transform_2(%arg0: i32) -> (i32, i32) {
    %c0_i32 = arith.constant 0 : i32
    %c0_i32_0 = arith.constant 0 : i32
    return %arg0, %c0_i32 : i32, i32
  }
}

</mosaic_0001>

<llo_original>
// kernel: tpu_custom_call.1
$region0: #{tpu_custom_call.1}
  #allocation0 [shape = 'u32[]', space=smem, size = 0x4, offset = 0x4, fixed_abs, tag = 'smem constant byte address 0x4 - core index']
  #allocation1 [shape = 'u32[144,128]{1,0:T(1,128)}', space=vmem, size = 0x12000, scoped, tag = 'internal scratch']
  %s0 = inlined_call_operand.vmem [shape: s32[16,1], index: 0, kind: input, shape index: {}]
  %s1 = inlined_call_operand.hbm [shape: f32[128,128], index: 1, kind: input, shape index: {}]
  %s2 = inlined_call_operand.hbm [shape: f32[16,128], index: 2, kind: output, shape index: {}]
  %s3 = sld [smem:[#allocation0]]
  $region22: #{tpu_custom_call.1} parent=0
    _
  %s5 = ssub.s32 1, %s3
  %s6 = scalar_select 0, %s5, %s3
  $region1: #{tpu_custom_call.1} parent=0
    #allocation2 [shape = 'u8[65536]{0}', space=vmem, size = 0x10000, scoped, tag = 'input window, operand 1, single buffered']
    #allocation3 [shape = 's32[1]{0}', space=sflag, size = 0x4, scoped, tag = 'scoped memory for tpu_custom_call.1']
    #allocation4 [shape = 's32[1]{0}', space=sflag, size = 0x4, scoped, tag = 'scoped memory for tpu_custom_call.1']
    #allocation5 [shape = 'u8[8192]{0}', space=vmem, size = 0x2000, scoped, tag = 'output window, operand 0, single buffered']
    %7 = vsyncpa [#allocation3], 0
    %8 = vsyncpa [#allocation4], 0
    // Predicated region
    $region2: #{tpu_custom_call.1} parent=1 // pred_check
      _
    $region3: #{tpu_custom_call.1} parent=1 // pred_check_branch
      %10 = sbr.rel (0) target = $region5
    $region4: #{tpu_custom_call.1} parent=1 // pred_region
      _
    $region5: #{tpu_custom_call.1} parent=1 // pred_fallthru
      _
    // Predicated region
    $region6: #{tpu_custom_call.1} parent=1 // pred_check
      _
    $region7: #{tpu_custom_call.1} parent=1 // pred_check_branch
      %12 = sbr.rel (0) target = $region9
    $region8: #{tpu_custom_call.1} parent=1 // pred_region
      %s14 = ssub.s32 2048, 2048
      %15 = vsyncadd [#allocation3], %s14
      %s16 = sshll.u32 [#allocation2], 4
      %s17 = int_to_ptr.vmem [resolvable:$true] %s16
      %22 = dma.hbm_to_vmem [thread:$0]  %s1, 2048, %s17, [#allocation3], 128, 128, 8
    $region9: #{tpu_custom_call.1} parent=1 // pred_fallthru
      _
    // Predicated region
    $region10: #{tpu_custom_call.1} parent=1 // pred_check
      _
    $region11: #{tpu_custom_call.1} parent=1 // pred_check_branch
      %24 = sbr.rel (0) target = $region13
    $region12: #{tpu_custom_call.1} parent=1 // pred_region
      %25 = dma.done [#allocation3], 2048
    $region13: #{tpu_custom_call.1} parent=1 // pred_fallthru
      _
    %v26 = vld [vmem:[%s0] sm:$0xff]
    %v27 = vld [vmem:[%s0 + $0x8] sm:$0xff]
    %v28 = vlaneseq
    %v29 = vand.u32 %v28, 127
    %30 = vset.pattern.permute.xlu0 0
    %31 = vperm.xlu0 %30, %v26
    %v32 = vpop.permute.xlu0 %31
    %33 = vset.pattern.permute.xlu0 0
    %34 = vperm.xlu0 %33, %v27
    %v35 = vpop.permute.xlu0 %34
    %vm36 = vcmp.eq.s32.totalorder %v29, %v32
    %vm37 = vcmp.eq.s32.totalorder %v29, %v35
    %v38 = vsel %vm36, 1, 0
    %v39 = vsel %vm37, 1, 0
    %v40 = vcvt.s32.f32 %v38
    %v41 = vcvt.s32.f32 %v39
    %v42 = vld [vmem:[#allocation2] sm:$0xff]
    %v43 = vld [vmem:[#allocation2 + $0x8] sm:$0xff]
    %v44 = vld [vmem:[#allocation2 + $0x10] sm:$0xff]
    %v45 = vld [vmem:[#allocation2 + $0x18] sm:$0xff]
    %v46 = vld [vmem:[#allocation2 + $0x20] sm:$0xff]
    %v47 = vld [vmem:[#allocation2 + $0x28] sm:$0xff]
    %v48 = vld [vmem:[#allocation2 + $0x30] sm:$0xff]
    %v49 = vld [vmem:[#allocation2 + $0x38] sm:$0xff]
    %v50 = vld [vmem:[#allocation2 + $0x40] sm:$0xff]
    %v51 = vld [vmem:[#allocation2 + $0x48] sm:$0xff]
    %v52 = vld [vmem:[#allocation2 + $0x50] sm:$0xff]
    %v53 = vld [vmem:[#allocation2 + $0x58] sm:$0xff]
    %v54 = vld [vmem:[#allocation2 + $0x60] sm:$0xff]
    %v55 = vld [vmem:[#allocation2 + $0x68] sm:$0xff]
    %v56 = vld [vmem:[#allocation2 + $0x70] sm:$0xff]
    %v57 = vld [vmem:[#allocation2 + $0x78] sm:$0xff]
    %58 = vmatprep.subr.mxu0 0.0
    %59 = vmatpush1.msra.mxu0 %v57
    %60 = vmatprep.subr.mxu0 0.0
    %61 = vmatpush1.msra.mxu0 %v56
    %62 = vmatprep.subr.mxu0 0.0
    %63 = vmatpush1.msra.mxu0 %v55
    %64 = vmatprep.subr.mxu0 0.0
    %65 = vmatpush1.msra.mxu0 %v54
    %66 = vmatprep.subr.mxu0 0.0
    %67 = vmatpush1.msra.mxu0 %v53
    %68 = vmatprep.subr.mxu0 0.0
    %69 = vmatpush1.msra.mxu0 %v52
    %70 = vmatprep.subr.mxu0 0.0
    %71 = vmatpush1.msra.mxu0 %v51
    %72 = vmatprep.subr.mxu0 0.0
    %73 = vmatpush1.msra.mxu0 %v50
    %74 = vmatprep.subr.mxu0 0.0
    %75 = vmatpush1.msra.mxu0 %v49
    %76 = vmatprep.subr.mxu0 0.0
    %77 = vmatpush1.msra.mxu0 %v48
    %78 = vmatprep.subr.mxu0 0.0
    %79 = vmatpush1.msra.mxu0 %v47
    %80 = vmatprep.subr.mxu0 0.0
    %81 = vmatpush1.msra.mxu0 %v46
    %82 = vmatprep.subr.mxu0 0.0
    %83 = vmatpush1.msra.mxu0 %v45
    %84 = vmatprep.subr.mxu0 0.0
    %85 = vmatpush1.msra.mxu0 %v44
    %86 = vmatprep.subr.mxu0 0.0
    %87 = vmatpush1.msra.mxu0 %v43
    %88 = vmatprep.subr.mxu0 0.0
    %89 = vmatpush1.msra.mxu0 %v42
    %90 = vmatprep.subr.mxu0 0.0
    %91 = vmatpush2.msra.mxu0 0.0
    %92 = vmatprep.subr.mxu0 0.0
    %93 = vmatpush2.msra.mxu0 0.0
    %94 = vmatprep.subr.mxu0 0.0
    %95 = vmatpush2.msra.mxu0 0.0
    %96 = vmatprep.subr.mxu0 0.0
    %97 = vmatpush2.msra.mxu0 0.0
    %98 = vmatprep.subr.mxu0 0.0
    %99 = vmatpush2.msra.mxu0 0.0
    %100 = vmatprep.subr.mxu0 0.0
    %101 = vmatpush2.msra.mxu0 0.0
    %102 = vmatprep.subr.mxu0 0.0
    %103 = vmatpush2.msra.mxu0 0.0
    %104 = vmatprep.subr.mxu0 0.0
    %105 = vmatpush2.msra.mxu0 0.0
    %106 = vmatprep.subr.mxu0 0.0
    %107 = vmatpush2.msra.mxu0 0.0
    %108 = vmatprep.subr.mxu0 0.0
    %109 = vmatpush2.msra.mxu0 0.0
    %110 = vmatprep.subr.mxu0 0.0
    %111 = vmatpush2.msra.mxu0 0.0
    %112 = vmatprep.subr.mxu0 0.0
    %113 = vmatpush2.msra.mxu0 0.0
    %114 = vmatprep.subr.mxu0 0.0
    %115 = vmatpush2.msra.mxu0 0.0
    %116 = vmatprep.subr.mxu0 0.0
    %117 = vmatpush2.msra.mxu0 0.0
    %118 = vmatprep.subr.mxu0 0.0
    %119 = vmatpush2.msra.mxu0 0.0
    %120 = vmatprep.subr.mxu0 0.0
    %121 = vmatpush2.msra.mxu0 0.0
    %122 = vmatprep.mubr.f32.mxu0 0.0
    %123 = vmatmul.mubr.f32.gmra.mxu0 %v40
    %v124 = vpop.f32.mrf.mxu0
    %v125 = vadd.f32 0.0, %v124
    %v126 = vpop.f32.mrf.mxu0
    %127 = vmatprep.mubr.f32.mxu0 0.0
    %128 = vmatmul.mubr.f32.gmra.mxu0 %v41
    %v129 = vpop.f32.mrf.mxu0
    %v130 = vadd.f32 0.0, %v129
    %v131 = vpop.f32.mrf.mxu0
    %132 = vdwg.mxu0
    %133 = vst [vmem:[#allocation5] sm:$0xff] %v125
    %134 = vst [vmem:[#allocation5 + $0x8] sm:$0xff] %v130
    // Predicated region
    $region14: #{tpu_custom_call.1} parent=1 // pred_check
      _
    $region15: #{tpu_custom_call.1} parent=1 // pred_check_branch
      %136 = sbr.rel (0) target = $region17
    $region16: #{tpu_custom_call.1} parent=1 // pred_region
      %s138 = ssub.s32 256, 256
      %139 = vsyncadd [#allocation4], %s138
      %s140 = sshll.u32 [#allocation5], 4
      %s141 = int_to_ptr.vmem [resolvable:$true] %s140
      %146 = dma.vmem_to_hbm [thread:$0]  %s141, 256, %s2, [#allocation4], 128, 128, 8
    $region17: #{tpu_custom_call.1} parent=1 // pred_fallthru
      _
    // Predicated region
    $region18: #{tpu_custom_call.1} parent=1 // pred_check
      _
    $region19: #{tpu_custom_call.1} parent=1 // pred_check_branch
      %148 = sbr.rel (0) target = $region21
    $region20: #{tpu_custom_call.1} parent=1 // pred_region
      %149 = dma.done [#allocation4], 256
    $region21: #{tpu_custom_call.1} parent=1 // pred_fallthru
      _
    %150 = vsyncpa [#allocation3], 1
    %151 = vsyncpa [#allocation4], 1

</llo_original>
